<compile_context>
chip_gen: v7x
topology: tpu7x:2x2x1
jax: 0.10.0
libtpu: 0.0.40
codegen_flags: <defaults>
</compile_context>

<pallas_src>
import functools

import jax
import jax.numpy as jnp
from jax.experimental import pallas as pl
from jax.experimental.pallas import tpu as pltpu


_LANE = 128
_SUBLANE = 8


def _vmem_capacity_bytes():
    try:
        info = pltpu.get_tpu_info()
        cap = getattr(info, "vmem_capacity_bytes", None)
        if cap:
            return int(cap)
    except Exception:
        pass
    return 64 << 20  # conservative floor (v7x per-TensorCore VMEM)


def _gather_rows_vmem_kernel(idx_ref, w_ref, out_ref, *, rows_per_batch):
    """Row gather with the embedding table resident in VMEM.

    idx_ref : SMEM [b_s * R] int32  (scalar-prefetch; per-batch contiguous)
    w_ref   : VMEM [C, D]           (full table; constant index_map -> DMA'd once)
    out_ref : VMEM [R, D]           (output block for batch row b)
    """
    b = pl.program_id(0)
    base = b * rows_per_batch
    if rows_per_batch <= 128:
        # Static unroll: R is small; output offsets are static.
        for r in range(rows_per_batch):
            idx = idx_ref[base + r]
            out_ref[pl.ds(r, 1), :] = w_ref[pl.ds(idx, 1), :]
    else:
        def body(r, carry):
            idx = idx_ref[base + r]
            out_ref[pl.ds(r, 1), :] = w_ref[pl.ds(idx, 1), :]
            return carry
        jax.lax.fori_loop(0, rows_per_batch, body, 0)


def _gather_rows_hbm_kernel(idx_ref, w_hbm_ref, out_ref, copy_sems, *,
                            rows_per_batch):
    """Row gather with the table left in HBM (VMEM footprint independent of C).

    Issues one async row DMA per needed row (all in flight concurrently),
    landing directly in the pipelined output block -- no VMEM staging copy,
    no table residency, HBM traffic is N*D bytes instead of C*D.
    """
    b = pl.program_id(0)
    base = b * rows_per_batch
    copies = []
    for r in range(rows_per_batch):
        idx = idx_ref[base + r]
        cp = pltpu.make_async_copy(
            w_hbm_ref.at[pl.ds(idx, 1), :],
            out_ref.at[pl.ds(r, 1), :],
            copy_sems.at[r],
        )
        cp.start()
        copies.append(cp)
    for cp in copies:
        cp.wait()


def selector_forward(relation, all_y, weight, *, impl="auto"):
    """relation: [b_s, 1] int, all_y: [b_s, num_rel] int,
    weight: [num_classes, relation_dim] float (relation_emb.weight).

    Returns (W_L [b_s, 1, D], weight, W_all_y [b_s, num_rel, D]).

    impl: "auto" | "vmem" | "hbm" | "xla"
    """
    b_s, n_lhs = relation.shape          # n_lhs == 1 per module contract
    num_rel = all_y.shape[1]
    C, D = weight.shape
    R = n_lhs + num_rel                  # fused rows per batch: [rel | all_y]

    # Fused, per-batch-contiguous index row.  Out-of-range indices are clamped
    # (torch.nn.Embedding would raise; callers must not rely on that).
    idx = jnp.clip(
        jnp.concatenate([relation, all_y], axis=1).astype(jnp.int32), 0, C - 1
    ).reshape(b_s * R)

    itemsize = jnp.dtype(weight.dtype).itemsize
    pad_rows = lambda n: -(-n // _SUBLANE) * _SUBLANE
    pad_cols = lambda n: -(-n // _LANE) * _LANE
    table_bytes = pad_rows(C) * pad_cols(D) * itemsize
    out_block_bytes = pad_rows(R) * pad_cols(D) * itemsize
    capacity = _vmem_capacity_bytes()

    if impl == "auto":
        if b_s * R * D <= 4096:
            impl = "xla"                 # kernel would be pure launch overhead
        elif table_bytes > 0.4 * capacity:
            impl = "hbm"                 # table too big to be VMEM-resident
        else:
            impl = "vmem"

    if impl == "xla":
        out = jnp.take(weight, idx.reshape(b_s, R), axis=0)
        return out[:, :n_lhs, :], weight, out[:, n_lhs:, :]

    out_shape = jax.ShapeDtypeStruct((b_s, R, D), weight.dtype)
    out_spec = pl.BlockSpec((None, R, D), lambda b, idx_ref: (b, 0, 0))

    if impl == "vmem":
        kernel = functools.partial(_gather_rows_vmem_kernel, rows_per_batch=R)
        # Constant index_map -> table DMA'd to VMEM once, resident across grid.
        in_specs = [pl.BlockSpec((C, D), lambda b, idx_ref: (0, 0))]
        scratch_shapes = ()
        needed = table_bytes + 2 * out_block_bytes + (1 << 20)
    elif impl == "hbm":
        kernel = functools.partial(_gather_rows_hbm_kernel, rows_per_batch=R)
        in_specs = [pl.BlockSpec(memory_space=pl.ANY)]
        scratch_shapes = (pltpu.SemaphoreType.DMA((R,)),)
        needed = 2 * out_block_bytes + (1 << 20)
    else:
        raise ValueError(f"unknown impl: {impl}")

    # VMEM budget: 2x headroom, floor at 8 MiB, never clamped below the actual
    # footprint, and kept under physical capacity (v7x 64 MiB / v5e-v6e 128 MiB).
    vmem_limit = int(min(max(2 * needed, 8 << 20),
                         max(needed, capacity - (4 << 20))))

    out = pl.pallas_call(
        kernel,
        out_shape=out_shape,
        grid_spec=pltpu.PrefetchScalarGridSpec(
            num_scalar_prefetch=1,       # idx lives in SMEM, not a VMEM column
            grid=(b_s,),
            in_specs=in_specs,
            out_specs=out_spec,
            scratch_shapes=scratch_shapes,
        ),
        compiler_params=pltpu.CompilerParams(
            dimension_semantics=("parallel",),   # batch rows independent (2 TCs on v7x)
            vmem_limit_bytes=vmem_limit,
        ),
    )(idx, weight)

    return out[:, :n_lhs, :], weight, out[:, n_lhs:, :]


def xavier_uniform(key, shape, dtype=jnp.float32):
    # matches torch.nn.init.xavier_uniform_ for a 2-D [fan_out, fan_in] weight
    fan_out, fan_in = shape
    bound = (6.0 / (fan_in + fan_out)) ** 0.5
    return jax.random.uniform(key, shape, dtype=dtype, minval=-bound, maxval=bound)


if __name__ == "__main__":
    # config: num_classes=8, relation_dim=32; batch=2, num_rel=8
    num_classes = 8
    relation_dim = 32
    b_s = 2
    num_rel = 8

    key = jax.random.PRNGKey(0)
    k_w, k_rel, k_y = jax.random.split(key, 3)

    weight = xavier_uniform(k_w, (num_classes, relation_dim))   # relation_emb.weight
    relation = jax.random.randint(k_rel, (b_s, 1), 0, num_classes, dtype=jnp.int32)
    all_y = jax.random.randint(k_y, (b_s, num_rel), 0, num_classes, dtype=jnp.int32)

    # reference: plain-JAX embedding lookup
    W_L_ref = jnp.take(weight, relation, axis=0)       # [b_s, 1, D]
    W_all_y_ref = jnp.take(weight, all_y, axis=0)      # [b_s, num_rel, D]

    # Exercise both Pallas paths explicitly, plus the size-gated "auto" path
    # (which at demo size picks the plain-XLA gather).
    for impl in ("vmem", "hbm", "auto"):
        W_L, W, W_all_y = selector_forward(relation, all_y, weight, impl=impl)
        jax.block_until_ready((W_L, W, W_all_y))
        assert W_L.shape == (b_s, 1, relation_dim), impl
        assert W_all_y.shape == (b_s, num_rel, relation_dim), impl
        # gather is a pure row copy -> bit-exact
        assert jnp.array_equal(W_L, W_L_ref), impl
        assert jnp.array_equal(W_all_y, W_all_y_ref), impl
        assert jnp.array_equal(W, weight), impl

    print("KERNEL_OK")
</pallas_src>

<mosaic_0001>
module attributes {stable_mosaic.version = 11 : i64} {
  func.func @_gather_rows_vmem_kernel(%arg0: i32, %arg1: memref<18xi32, #tpu.memory_space<smem>>, %arg2: memref<8x32xf32, #tpu.memory_space<vmem>>, %arg3: memref<1x9x32xf32, #tpu.memory_space<vmem>>) attributes {dimension_semantics = [#tpu.dimension_semantics<parallel>], iteration_bounds = array<i64: 2>, scalar_prefetch = 1 : i64, scratch_operands = 0 : i64, tpu.core_type = #tpu.core_type<tc>, window_params = [{pipeline_mode = #tpu.pipeline_mode<synchronous>, transform_indices = @transform_0, window_bounds = array<i64: 8, 32>}, {transform_indices = @transform_1, window_bounds = array<i64: 1, 9, 32>}]} {
    %c9_i32 = arith.constant 9 : i32
    %0 = arith.muli %arg0, %c9_i32 : i32
    %c0_i32 = arith.constant 0 : i32
    %1 = arith.addi %0, %c0_i32 : i32
    %2 = arith.index_cast %1 : i32 to index
    %3 = memref.load %arg1[%2] : memref<18xi32, #tpu.memory_space<smem>>
    %4 = arith.index_cast %3 : i32 to index
    %c0 = arith.constant 0 : index
    %5 = vector.load %arg2[%4, %c0] : memref<8x32xf32, #tpu.memory_space<vmem>>, vector<1x32xf32>
    %c0_0 = arith.constant 0 : index
    %c0_1 = arith.constant 0 : index
    %c0_2 = arith.constant 0 : index
    %6 = vector.load %arg3[%c0_0, %c0_1, %c0_2] : memref<1x9x32xf32, #tpu.memory_space<vmem>>, vector<1x1x32xf32>
    %7 = vector.shape_cast %6 : vector<1x1x32xf32> to vector<1x32xf32>
    %8 = vector.shape_cast %5 : vector<1x32xf32> to vector<1x1x32xf32>
    tpu.vector_store %arg3[%c0_0, %c0_1, %c0_2], %8 {strides = array<i32>} : memref<1x9x32xf32, #tpu.memory_space<vmem>>, vector<1x1x32xf32>,
    %c1_i32 = arith.constant 1 : i32
    %9 = arith.addi %0, %c1_i32 : i32
    %10 = arith.index_cast %9 : i32 to index
    %11 = memref.load %arg1[%10] : memref<18xi32, #tpu.memory_space<smem>>
    %12 = arith.index_cast %11 : i32 to index
    %c0_3 = arith.constant 0 : index
    %13 = vector.load %arg2[%12, %c0_3] : memref<8x32xf32, #tpu.memory_space<vmem>>, vector<1x32xf32>
    %c0_4 = arith.constant 0 : index
    %c1 = arith.constant 1 : index
    %c0_5 = arith.constant 0 : index
    %14 = vector.load %arg3[%c0_4, %c1, %c0_5] : memref<1x9x32xf32, #tpu.memory_space<vmem>>, vector<1x1x32xf32>
    %15 = vector.shape_cast %14 : vector<1x1x32xf32> to vector<1x32xf32>
    %16 = vector.shape_cast %13 : vector<1x32xf32> to vector<1x1x32xf32>
    tpu.vector_store %arg3[%c0_4, %c1, %c0_5], %16 {strides = array<i32>} : memref<1x9x32xf32, #tpu.memory_space<vmem>>, vector<1x1x32xf32>,
    %c2_i32 = arith.constant 2 : i32
    %17 = arith.addi %0, %c2_i32 : i32
    %18 = arith.index_cast %17 : i32 to index
    %19 = memref.load %arg1[%18] : memref<18xi32, #tpu.memory_space<smem>>
    %20 = arith.index_cast %19 : i32 to index
    %c0_6 = arith.constant 0 : index
    %21 = vector.load %arg2[%20, %c0_6] : memref<8x32xf32, #tpu.memory_space<vmem>>, vector<1x32xf32>
    %c0_7 = arith.constant 0 : index
    %c2 = arith.constant 2 : index
    %c0_8 = arith.constant 0 : index
    %22 = vector.load %arg3[%c0_7, %c2, %c0_8] : memref<1x9x32xf32, #tpu.memory_space<vmem>>, vector<1x1x32xf32>
    %23 = vector.shape_cast %22 : vector<1x1x32xf32> to vector<1x32xf32>
    %24 = vector.shape_cast %21 : vector<1x32xf32> to vector<1x1x32xf32>
    tpu.vector_store %arg3[%c0_7, %c2, %c0_8], %24 {strides = array<i32>} : memref<1x9x32xf32, #tpu.memory_space<vmem>>, vector<1x1x32xf32>,
    %c3_i32 = arith.constant 3 : i32
    %25 = arith.addi %0, %c3_i32 : i32
    %26 = arith.index_cast %25 : i32 to index
    %27 = memref.load %arg1[%26] : memref<18xi32, #tpu.memory_space<smem>>
    %28 = arith.index_cast %27 : i32 to index
    %c0_9 = arith.constant 0 : index
    %29 = vector.load %arg2[%28, %c0_9] : memref<8x32xf32, #tpu.memory_space<vmem>>, vector<1x32xf32>
    %c0_10 = arith.constant 0 : index
    %c3 = arith.constant 3 : index
    %c0_11 = arith.constant 0 : index
    %30 = vector.load %arg3[%c0_10, %c3, %c0_11] : memref<1x9x32xf32, #tpu.memory_space<vmem>>, vector<1x1x32xf32>
    %31 = vector.shape_cast %30 : vector<1x1x32xf32> to vector<1x32xf32>
    %32 = vector.shape_cast %29 : vector<1x32xf32> to vector<1x1x32xf32>
    tpu.vector_store %arg3[%c0_10, %c3, %c0_11], %32 {strides = array<i32>} : memref<1x9x32xf32, #tpu.memory_space<vmem>>, vector<1x1x32xf32>,
    %c4_i32 = arith.constant 4 : i32
    %33 = arith.addi %0, %c4_i32 : i32
    %34 = arith.index_cast %33 : i32 to index
    %35 = memref.load %arg1[%34] : memref<18xi32, #tpu.memory_space<smem>>
    %36 = arith.index_cast %35 : i32 to index
    %c0_12 = arith.constant 0 : index
    %37 = vector.load %arg2[%36, %c0_12] : memref<8x32xf32, #tpu.memory_space<vmem>>, vector<1x32xf32>
    %c0_13 = arith.constant 0 : index
    %c4 = arith.constant 4 : index
    %c0_14 = arith.constant 0 : index
    %38 = vector.load %arg3[%c0_13, %c4, %c0_14] : memref<1x9x32xf32, #tpu.memory_space<vmem>>, vector<1x1x32xf32>
    %39 = vector.shape_cast %38 : vector<1x1x32xf32> to vector<1x32xf32>
    %40 = vector.shape_cast %37 : vector<1x32xf32> to vector<1x1x32xf32>
    tpu.vector_store %arg3[%c0_13, %c4, %c0_14], %40 {strides = array<i32>} : memref<1x9x32xf32, #tpu.memory_space<vmem>>, vector<1x1x32xf32>,
    %c5_i32 = arith.constant 5 : i32
    %41 = arith.addi %0, %c5_i32 : i32
    %42 = arith.index_cast %41 : i32 to index
    %43 = memref.load %arg1[%42] : memref<18xi32, #tpu.memory_space<smem>>
    %44 = arith.index_cast %43 : i32 to index
    %c0_15 = arith.constant 0 : index
    %45 = vector.load %arg2[%44, %c0_15] : memref<8x32xf32, #tpu.memory_space<vmem>>, vector<1x32xf32>
    %c0_16 = arith.constant 0 : index
    %c5 = arith.constant 5 : index
    %c0_17 = arith.constant 0 : index
    %46 = vector.load %arg3[%c0_16, %c5, %c0_17] : memref<1x9x32xf32, #tpu.memory_space<vmem>>, vector<1x1x32xf32>
    %47 = vector.shape_cast %46 : vector<1x1x32xf32> to vector<1x32xf32>
    %48 = vector.shape_cast %45 : vector<1x32xf32> to vector<1x1x32xf32>
    tpu.vector_store %arg3[%c0_16, %c5, %c0_17], %48 {strides = array<i32>} : memref<1x9x32xf32, #tpu.memory_space<vmem>>, vector<1x1x32xf32>,
    %c6_i32 = arith.constant 6 : i32
    %49 = arith.addi %0, %c6_i32 : i32
    %50 = arith.index_cast %49 : i32 to index
    %51 = memref.load %arg1[%50] : memref<18xi32, #tpu.memory_space<smem>>
    %52 = arith.index_cast %51 : i32 to index
    %c0_18 = arith.constant 0 : index
    %53 = vector.load %arg2[%52, %c0_18] : memref<8x32xf32, #tpu.memory_space<vmem>>, vector<1x32xf32>
    %c0_19 = arith.constant 0 : index
    %c6 = arith.constant 6 : index
    %c0_20 = arith.constant 0 : index
    %54 = vector.load %arg3[%c0_19, %c6, %c0_20] : memref<1x9x32xf32, #tpu.memory_space<vmem>>, vector<1x1x32xf32>
    %55 = vector.shape_cast %54 : vector<1x1x32xf32> to vector<1x32xf32>
    %56 = vector.shape_cast %53 : vector<1x32xf32> to vector<1x1x32xf32>
    tpu.vector_store %arg3[%c0_19, %c6, %c0_20], %56 {strides = array<i32>} : memref<1x9x32xf32, #tpu.memory_space<vmem>>, vector<1x1x32xf32>,
    %c7_i32 = arith.constant 7 : i32
    %57 = arith.addi %0, %c7_i32 : i32
    %58 = arith.index_cast %57 : i32 to index
    %59 = memref.load %arg1[%58] : memref<18xi32, #tpu.memory_space<smem>>
    %60 = arith.index_cast %59 : i32 to index
    %c0_21 = arith.constant 0 : index
    %61 = vector.load %arg2[%60, %c0_21] : memref<8x32xf32, #tpu.memory_space<vmem>>, vector<1x32xf32>
    %c0_22 = arith.constant 0 : index
    %c7 = arith.constant 7 : index
    %c0_23 = arith.constant 0 : index
    %62 = vector.load %arg3[%c0_22, %c7, %c0_23] : memref<1x9x32xf32, #tpu.memory_space<vmem>>, vector<1x1x32xf32>
    %63 = vector.shape_cast %62 : vector<1x1x32xf32> to vector<1x32xf32>
    %64 = vector.shape_cast %61 : vector<1x32xf32> to vector<1x1x32xf32>
    tpu.vector_store %arg3[%c0_22, %c7, %c0_23], %64 {strides = array<i32>} : memref<1x9x32xf32, #tpu.memory_space<vmem>>, vector<1x1x32xf32>,
    %c8_i32 = arith.constant 8 : i32
    %65 = arith.addi %0, %c8_i32 : i32
    %66 = arith.index_cast %65 : i32 to index
    %67 = memref.load %arg1[%66] : memref<18xi32, #tpu.memory_space<smem>>
    %68 = arith.index_cast %67 : i32 to index
    %c0_24 = arith.constant 0 : index
    %69 = vector.load %arg2[%68, %c0_24] : memref<8x32xf32, #tpu.memory_space<vmem>>, vector<1x32xf32>
    %c0_25 = arith.constant 0 : index
    %c8 = arith.constant 8 : index
    %c0_26 = arith.constant 0 : index
    %70 = vector.load %arg3[%c0_25, %c8, %c0_26] : memref<1x9x32xf32, #tpu.memory_space<vmem>>, vector<1x1x32xf32>
    %71 = vector.shape_cast %70 : vector<1x1x32xf32> to vector<1x32xf32>
    %72 = vector.shape_cast %69 : vector<1x32xf32> to vector<1x1x32xf32>
    tpu.vector_store %arg3[%c0_25, %c8, %c0_26], %72 {strides = array<i32>} : memref<1x9x32xf32, #tpu.memory_space<vmem>>, vector<1x1x32xf32>,
    return
  }
  func.func @transform_0(%arg0: i32, %arg1: memref<18xi32, #tpu.memory_space<smem>>) -> (i32, i32) {
    %c0_i32 = arith.constant 0 : i32
    %c0_i32_0 = arith.constant 0 : i32
    %c0_i32_1 = arith.constant 0 : i32
    return %c0_i32, %c0_i32_0 : i32, i32
  }
  func.func @transform_1(%arg0: i32, %arg1: memref<18xi32, #tpu.memory_space<smem>>) -> (i32, i32, i32) {
    %c0_i32 = arith.constant 0 : i32
    %c0_i32_0 = arith.constant 0 : i32
    %c0_i32_1 = arith.constant 0 : i32
    return %arg0, %c0_i32, %c0_i32_0 : i32, i32, i32
  }
}

</mosaic_0001>

<llo_original>
// kernel: tpu_custom_call.1
$region0: #{tpu_custom_call.1}
  #allocation0 [shape = 'u32[]', space=smem, size = 0x4, offset = 0x4, fixed_abs, tag = 'smem constant byte address 0x4 - core index']
  #allocation1 [shape = 'u32[144,128]{1,0:T(1,128)}', space=vmem, size = 0x12000, scoped, tag = 'internal scratch']
  #allocation2 [shape = 's32[1]{0}', space=sflag, size = 0x4, scoped, tag = 'scoped memory for tpu_custom_call.1']
  #allocation3 [shape = 'u8[512]{0}', space=smem, size = 0x200, scoped, tag = 'prefetched SMEM operand 0']
  %s0 = inlined_call_operand.hbm [shape: s32[18], index: 0, kind: input, shape index: {}]
  %s1 = inlined_call_operand.hbm [shape: f32[8,32], index: 1, kind: input, shape index: {}]
  %s2 = inlined_call_operand.vmem [shape: f32[2,9,32], index: 2, kind: output, shape index: {}]
  %s3 = sld [smem:[#allocation0]]
  $region41: #{tpu_custom_call.1} parent=0
    _
  %s5 = ssub.s32 1, %s3
  %s6 = scalar_select 0, %s5, %s3
  %8 = dma.hbm_to_smem %s0, 16, [#allocation3], [#allocation2]
  %9 = dma.done [#allocation2], 16
  %10 = sfence
  $region1: #{tpu_custom_call.1} parent=0
    #allocation4 [shape = 'u8[4096]{0}', space=vmem, size = 0x1000, scoped, tag = 'input window, operand 1, single buffered']
    #allocation5 [shape = 's32[2]{0}', space=sflag, size = 0x8, scoped, tag = 'scoped memory for tpu_custom_call.1']
    %11 = vsyncpa [#allocation5], 0
    loop: start=0, step=1, limit=4
    $region2: #{tpu_custom_call.1} parent=1 // loop_pre_header
      _
    $region3: #{tpu_custom_call.1} parent=1 // loop_header
      %s13 = sphi 0, %s17
      %p14 = scmp.ge.s32.totalorder %s13, 4
      %s21 = sphi 0, %s21
      %s23 = sphi 0, %s21
      %s24 = sphi 0, %s23
      %s38 = sphi 0, %s24
      %s44 = sphi 0, %s46
      %s47 = sphi 0, %s44
      %s48 = sphi 0, %s47
      %s64 = sphi 0, %s48
    $region4: #{tpu_custom_call.1} parent=1 // loop_header_branch
      %16 = sbr.rel (%p14) target = $region8
    $region5: #{tpu_custom_call.1} parent=1 // loop_body
      %s18 = ssub.s32 %s13, 1
      %s19 = ssub.s32 %s13, 2
      %s20 = sadd.s32 %s13, 1
      %s22 = sadd.s32 %s21, 1
      %p25 = scmp.eq.s32.totalorder %s13, 1
      %p26 = scmp.ne.s32.totalorder %s21, %s23
      %p27 = scmp.eq.s32.totalorder %s13, 0
      %p28 = por %p26, %p27
      %p29 = scmp.ne.s32.totalorder %s21, %s23
      %p30 = scmp.eq.s32.totalorder %s18, 1
      %p31 = por %p29, %p30
      %p32 = scmp.ne.s32.totalorder %s23, %s24
      %p33 = scmp.eq.s32.totalorder %s18, 0
      %p34 = por %p32, %p33
      %p35 = scmp.ne.s32.totalorder %s23, %s24
      %p36 = scmp.eq.s32.totalorder %s19, 1
      %p37 = por %p35, %p36
      %p39 = scmp.ne.s32.totalorder %s24, %s38
      %p40 = scmp.eq.s32.totalorder %s19, 0
      %p41 = por %p39, %p40
      %s42 = ssub.s32 %s13, %s20
      %p43 = scmp.eq.s32.totalorder %s42, 0
      %s45 = sadd.s32 %s44, 1
      %s46 = scalar_select %p43, %s44, %s45
      %p49 = pneg %p43
      %p50 = scmp.eq.s32.totalorder %s13, 1
      %p51 = por %p49, %p50
      %p52 = scmp.ne.s32.totalorder %s44, %s47
      %p53 = scmp.eq.s32.totalorder %s13, 0
      %p54 = por %p52, %p53
      %p55 = scmp.ne.s32.totalorder %s44, %s47
      %p56 = scmp.eq.s32.totalorder %s18, 1
      %p57 = por %p55, %p56
      %p58 = scmp.ne.s32.totalorder %s47, %s48
      %p59 = scmp.eq.s32.totalorder %s18, 0
      %p60 = por %p58, %p59
      %p61 = scmp.ne.s32.totalorder %s47, %s48
      %p62 = scmp.eq.s32.totalorder %s19, 1
      %p63 = por %p61, %p62
      %p65 = scmp.ne.s32.totalorder %s48, %s64
      %p66 = scmp.eq.s32.totalorder %s19, 0
      %p67 = por %p65, %p66
      %p68 = scmp.le.s32.totalorder 1, %s13
      %p69 = scmp.lt.s32.totalorder %s13, 3
      %p70 = pnand %p68, %p69
      %p71 = pneg %p70
      // Predicated region
      $region9: #{tpu_custom_call.1} parent=5 // pred_check
        _
      $region10: #{tpu_custom_call.1} parent=5 // pred_check_branch
        %73 = sbr.rel (%p70) target = $region12
      $region11: #{tpu_custom_call.1} parent=5 // pred_region
        %s74 = ssub.s32 %s13, 1
        // Predicated region
        $region13: #{tpu_custom_call.1} parent=11 // pred_check
          %p75 = pneg %p34
        $region14: #{tpu_custom_call.1} parent=11 // pred_check_branch
          %77 = sbr.rel (%p75) target = $region16
        $region15: #{tpu_custom_call.1} parent=11 // pred_region
          %s79 = ssub.s32 128, 128
          %80 = vsyncadd [#allocation5], %s79
          %s82 = sshll.u32 [#allocation4], 4
          %s83 = int_to_ptr.vmem [resolvable:$true] %s82
          %85 = dma.hbm_to_vmem [thread:$0]  %s1, 128, %s83, [#allocation5]
        $region16: #{tpu_custom_call.1} parent=11 // pred_fallthru
          _
      $region12: #{tpu_custom_call.1} parent=5 // pred_fallthru
        _
      %p86 = scmp.lt.s32.totalorder %s13, 2
      // Predicated region
      $region17: #{tpu_custom_call.1} parent=5 // pred_check
        %p87 = pneg %p86
      $region18: #{tpu_custom_call.1} parent=5 // pred_check_branch
        %89 = sbr.rel (%p87) target = $region20
      $region19: #{tpu_custom_call.1} parent=5 // pred_region
        _
      $region20: #{tpu_custom_call.1} parent=5 // pred_fallthru
        _
      %p90 = scmp.le.s32.totalorder 1, %s13
      %p91 = scmp.lt.s32.totalorder %s13, 3
      %p92 = pnand %p90, %p91
      %p93 = pneg %p92
      // Predicated region
      $region21: #{tpu_custom_call.1} parent=5 // pred_check
        _
      $region22: #{tpu_custom_call.1} parent=5 // pred_check_branch
        %95 = sbr.rel (%p92) target = $region24
      $region23: #{tpu_custom_call.1} parent=5 // pred_region
        %s96 = ssub.s32 %s13, 1
        // Predicated region
        $region25: #{tpu_custom_call.1} parent=23 // pred_check
          %p97 = pneg %p34
        $region26: #{tpu_custom_call.1} parent=23 // pred_check_branch
          %99 = sbr.rel (%p97) target = $region28
        $region27: #{tpu_custom_call.1} parent=23 // pred_region
          %100 = dma.done [#allocation5], 128
        $region28: #{tpu_custom_call.1} parent=23 // pred_fallthru
          _
        %p101 = pneg %p34
        %p102 = pneg %p31
        %p103 = pneg %p60
        %p104 = pneg %p57
        %p105 = scmp.lt.s32.totalorder %s18, 1
        %s106 = scalar_select %p105, %s18, 1
        %s107 = smul.addr %s106, 2
        %s108 = smul.addr %s107, 8
        %s109 = scalar_lea.vmem %s2, %s108
        %p110 = scmp.lt.s32.totalorder %s18, 1
        %s111 = scalar_select %p110, %s18, 1
        %s112 = smul.addr %s111, 2
        %s113 = smul.addr %s112, 8
        %s114 = scalar_lea.vmem %s2, %s113
        %s115 = smul.u32 %s18, 9
        %s116 = sld [smem:[#allocation3 + %s115]]
        %s117 = scalar_lea.vmem [#allocation4], %s116
        %v118 = vld [vmem:[%s117] sm:$0x1]
        %vm119 = vcmask 253952
        %120 = vst.msk [vmem:[%s114] sm:$0x1] %vm119, %v118
        %s121 = sadd.s32 %s115, 1
        %s122 = sld [smem:[#allocation3 + %s121]]
        %s123 = scalar_lea.vmem [#allocation4], %s122
        %v124 = vld [vmem:[%s123] sm:$0x1]
        %125 = vst.msk [vmem:[%s114 + $0x1] sm:$0x1] %vm119, %v124
        %s126 = sadd.s32 %s115, 2
        %s127 = sld [smem:[#allocation3 + %s126]]
        %s128 = scalar_lea.vmem [#allocation4], %s127
        %v129 = vld [vmem:[%s128] sm:$0x1]
        %130 = vst.msk [vmem:[%s114 + $0x2] sm:$0x1] %vm119, %v129
        %s131 = sadd.s32 %s115, 3
        %s132 = sld [smem:[#allocation3 + %s131]]
        %s133 = scalar_lea.vmem [#allocation4], %s132
        %v134 = vld [vmem:[%s133] sm:$0x1]
        %135 = vst.msk [vmem:[%s114 + $0x3] sm:$0x1] %vm119, %v134
        %s136 = sadd.s32 %s115, 4
        %s137 = sld [smem:[#allocation3 + %s136]]
        %s138 = scalar_lea.vmem [#allocation4], %s137
        %v139 = vld [vmem:[%s138] sm:$0x1]
        %140 = vst.msk [vmem:[%s114 + $0x4] sm:$0x1] %vm119, %v139
        %s141 = sadd.s32 %s115, 5
        %s142 = sld [smem:[#allocation3 + %s141]]
        %s143 = scalar_lea.vmem [#allocation4], %s142
        %v144 = vld [vmem:[%s143] sm:$0x1]
        %145 = vst.msk [vmem:[%s114 + $0x5] sm:$0x1] %vm119, %v144
        %s146 = sadd.s32 %s115, 6
        %s147 = sld [smem:[#allocation3 + %s146]]
        %s148 = scalar_lea.vmem [#allocation4], %s147
        %v149 = vld [vmem:[%s148] sm:$0x1]
        %150 = vst.msk [vmem:[%s114 + $0x6] sm:$0x1] %vm119, %v149
        %s151 = sadd.s32 %s115, 7
        %s152 = sld [smem:[#allocation3 + %s151]]
        %s153 = scalar_lea.vmem [#allocation4], %s152
        %v154 = vld [vmem:[%s153] sm:$0x1]
        %155 = vst.msk [vmem:[%s114 + $0x7] sm:$0x1] %vm119, %v154
        %s156 = sadd.s32 %s115, 8
        %s157 = sld [smem:[#allocation3 + %s156]]
        %s158 = scalar_lea.vmem [#allocation4], %s157
        %v159 = vld [vmem:[%s158] sm:$0x1]
        %160 = vst.msk [vmem:[%s114 + $0x8] sm:$0x1] %vm119, %v159
        %p161 = scmp.lt.s32.totalorder %s18, 1
        %s162 = scalar_select %p161, %s18, 1
        %s163 = smul.addr %s162, 2
        %s164 = smul.addr %s163, 8
        %s165 = scalar_lea.vmem %s2, %s164
        // Predicated region
        $region29: #{tpu_custom_call.1} parent=23 // pred_check
          %p166 = pneg %p57
        $region30: #{tpu_custom_call.1} parent=23 // pred_check_branch
          %168 = sbr.rel (%p166) target = $region32
        $region31: #{tpu_custom_call.1} parent=23 // pred_region
          _
        $region32: #{tpu_custom_call.1} parent=23 // pred_fallthru
          _
      $region24: #{tpu_custom_call.1} parent=5 // pred_fallthru
        _
      %p169 = scmp.le.s32.totalorder 2, %s13
      // Predicated region
      $region33: #{tpu_custom_call.1} parent=5 // pred_check
        %p170 = pneg %p169
      $region34: #{tpu_custom_call.1} parent=5 // pred_check_branch
        %172 = sbr.rel (%p170) target = $region36
      $region35: #{tpu_custom_call.1} parent=5 // pred_region
        %s173 = ssub.s32 %s13, 2
        // Predicated region
        $region37: #{tpu_custom_call.1} parent=35 // pred_check
          %p174 = pneg %p63
        $region38: #{tpu_custom_call.1} parent=35 // pred_check_branch
          %176 = sbr.rel (%p174) target = $region40
        $region39: #{tpu_custom_call.1} parent=35 // pred_region
          %p177 = scmp.lt.s32.totalorder %s19, 1
          %s178 = scalar_select %p177, %s19, 1
          %s179 = smul.addr %s178, 2
          %s180 = smul.addr %s179, 8
          %s181 = scalar_lea.vmem %s2, %s180
        $region40: #{tpu_custom_call.1} parent=35 // pred_fallthru
          _
      $region36: #{tpu_custom_call.1} parent=5 // pred_fallthru
        _
    $region6: #{tpu_custom_call.1} parent=1 // loop_footer
      %s17 = sadd.s32 1, %s13
    $region7: #{tpu_custom_call.1} parent=1 // loop_footer_branch
      %12 = sbr.rel target = $region3
    $region8: #{tpu_custom_call.1} parent=1 // loop_exit
      _
    %182 = vsyncpa [#allocation5], 1
    %s183 = scalar_lea.sflag [#allocation5], 1
    %184 = vsyncpa %s183, 1

</llo_original>
